<compile_context>
chip_gen: v7x
topology: tpu7x:2x2x1
jax: 0.10.0
libtpu: 0.0.40
codegen_flags: <defaults>
</compile_context>

<pallas_src>
import functools

import jax
import jax.numpy as jnp
from jax import lax
from jax.experimental import pallas as pl
from jax.experimental.pallas import tpu as pltpu


# ---------------------------------------------------------------------------
# Helpers
# ---------------------------------------------------------------------------

def _vmem_capacity_bytes():
    try:
        return int(pltpu.get_tpu_info().vmem_capacity_bytes)
    except Exception:
        return 128 << 20


def _target_tile_bytes(vmem_cap):
    # f32-footprint target per buffer: bigger tiles amortize the ~0.35us
    # per-grid-step overhead; v7x (64 MiB VMEM) gets 4 MiB, 128-MiB chips 8 MiB.
    return (4 << 20) if vmem_cap <= (64 << 20) else (8 << 20)


def _inv_pow(t, beta):
    # t ** (-beta) via multiplies; cheapest EUP chains for the common exponents.
    if beta == 0.75:
        r = lax.rsqrt(t)          # t^-0.5
        return r * jnp.sqrt(r)    # t^-0.75
    if beta == 0.5:
        return lax.rsqrt(t)
    if beta == 1.0:
        return 1.0 / t
    return jnp.exp(jnp.log(t) * (-beta))


# ---------------------------------------------------------------------------
# Kernels
# ---------------------------------------------------------------------------

def _lrn_elementwise_kernel(x_ref, o_ref, *, alpha, beta):
    # local_size == 1: avg(x^2) == x^2 -> purely elementwise.
    xf = x_ref[...].astype(jnp.float32)
    t = xf * xf * alpha + 1.0
    o_ref[...] = (xf * _inv_pow(t, beta)).astype(o_ref.dtype)


def _lrn_window_kernel(w_ref, x_ref, o_ref, *, beta):
    # x block: (C, T) (channels on sublanes, spatial on lanes).
    # w: (C, C) banded matrix pre-scaled by alpha/local_size, grid-invariant.
    xf = x_ref[...].astype(jnp.float32)
    x2 = xf * xf
    t = jnp.dot(w_ref[...], x2, preferred_element_type=jnp.float32) + 1.0
    o_ref[...] = (xf * _inv_pow(t, beta)).astype(o_ref.dtype)


# ---------------------------------------------------------------------------
# Wrappers
# ---------------------------------------------------------------------------

def _lrn_local1(x, alpha, beta):
    """Fast path for local_size == 1: flat 2D lane-dense elementwise kernel."""
    orig_shape = x.shape
    total = int(x.size)
    itemsize = jnp.dtype(x.dtype).itemsize
    elem_bytes = max(4, itemsize)                 # size tiles by f32 temporaries
    vmem_cap = _vmem_capacity_bytes()
    target = _target_tile_bytes(vmem_cap)

    # Choose a lane width (multiple of 128) that divides the element count so
    # no padding copy is needed in the common case.
    lanes = None
    for cand in (1024, 512, 256, 128):
        if total % cand == 0:
            lanes = cand
            break

    x_flat = x.reshape(-1)
    padded = total
    if lanes is None:
        # TODO(synk): rare case (numel % 128 != 0) pays one extra HBM round
        # trip for the pad/slice done by XLA outside the kernel.
        lanes = 1024
        padded = ((total + lanes - 1) // lanes) * lanes
        x_flat = jnp.pad(x_flat, (0, padded - total))

    rows = padded // lanes
    x2d = x_flat.reshape(rows, lanes)

    max_rt = max(8, (target // (lanes * elem_bytes)) // 8 * 8)
    if rows <= max_rt:
        row_tile = rows                      # single row-block (full-dim block)
        grid_r = 1
    else:
        row_tile = max_rt                    # multiple of 8; last block may be partial
        grid_r = pl.cdiv(rows, row_tile)

    tile_in = row_tile * lanes * itemsize
    tile_f32 = row_tile * lanes * 4
    vmem_limit = int(min(max(4 * tile_in + 6 * tile_f32 + (4 << 20), 32 << 20),
                         vmem_cap * 3 // 4))

    block = (row_tile, lanes)
    out = pl.pallas_call(
        functools.partial(_lrn_elementwise_kernel,
                          alpha=float(alpha), beta=float(beta)),
        out_shape=jax.ShapeDtypeStruct((rows, lanes), x.dtype),
        grid_spec=pltpu.PrefetchScalarGridSpec(
            num_scalar_prefetch=0,
            grid=(grid_r,),
            in_specs=[pl.BlockSpec(block, lambda i: (i, 0))],
            out_specs=pl.BlockSpec(block, lambda i: (i, 0)),
        ),
        compiler_params=pltpu.CompilerParams(
            dimension_semantics=("parallel",),
            vmem_limit_bytes=vmem_limit,
        ),
    )(x2d)

    out = out.reshape(-1)
    if padded != total:
        out = out[:total]
    return out.reshape(orig_shape)


def _lrn_window(x, local_size, alpha, beta):
    """General cross-channel path (odd local_size > 1): banded-matmul channel mix."""
    n, c, h, w = x.shape
    hw = h * w
    itemsize = jnp.dtype(x.dtype).itemsize
    elem_bytes = max(4, itemsize)
    vmem_cap = _vmem_capacity_bytes()
    target = _target_tile_bytes(vmem_cap)

    x2d = x.reshape(n, c, hw)

    # Spatial tile: keep the lane axis a multiple of 128 whenever possible.
    # (When hw < 128 the tile is hw wide -> masked stores, acceptable for tiny maps.)
    if c * hw * elem_bytes <= target:
        t_hw = hw
    else:
        t_hw = max(128, (target // (c * elem_bytes)) // 128 * 128)
        t_hw = min(t_hw, hw)
    grid = (n, pl.cdiv(hw, t_hw))

    # Banded ones matrix, pre-scaled by alpha/local_size, built once here and
    # kept VMEM-resident via a grid-invariant BlockSpec (DMA'd once).
    pad = (local_size - 1) // 2
    ch = jnp.arange(c)
    off = ch[None, :] - ch[:, None]
    band = ((off >= -pad) & (off <= local_size - 1 - pad)).astype(jnp.float32)
    wmat = band * (float(alpha) / float(local_size))

    tile_in = c * t_hw * itemsize
    tile_f32 = c * t_hw * 4
    vmem_limit = int(min(max(4 * tile_in + 6 * tile_f32 + 2 * c * c * 4 + (4 << 20),
                             32 << 20),
                         vmem_cap * 3 // 4))

    block = (pl.Squeezed(), c, t_hw)
    idx = lambda i, j: (i, 0, j)

    out = pl.pallas_call(
        functools.partial(_lrn_window_kernel, beta=float(beta)),
        out_shape=jax.ShapeDtypeStruct((n, c, hw), x.dtype),
        grid_spec=pltpu.PrefetchScalarGridSpec(
            num_scalar_prefetch=0,
            grid=grid,
            in_specs=[pl.BlockSpec((c, c), lambda i, j: (0, 0)),  # grid-invariant
                      pl.BlockSpec(block, idx)],
            out_specs=pl.BlockSpec(block, idx),
        ),
        compiler_params=pltpu.CompilerParams(
            dimension_semantics=("parallel", "parallel"),
            vmem_limit_bytes=vmem_limit,
        ),
    )(wmat, x2d)

    return out.reshape(n, c, h, w)


def lrn(x, local_size=1, alpha=1.0, beta=0.75):
    """x: (N, C, H, W) float array. Returns LRN-normalized array, same shape."""
    if local_size == 1:
        return _lrn_local1(x, alpha, beta)
    if local_size % 2 == 0:
        # AvgPool3d same-size output over channels requires symmetric padding.
        raise ValueError("lrn: local_size must be odd (got %d)" % local_size)
    return _lrn_window(x, local_size, alpha, beta)


# ---------------------------------------------------------------------------
# Pure-JAX reference (AvgPool3d over channels, count_include_pad=True)
# ---------------------------------------------------------------------------

def _lrn_ref(x, local_size=1, alpha=1.0, beta=0.75):
    pad = int((local_size - 1.0) / 2)
    x2 = x * x
    x2p = jnp.pad(x2, ((0, 0), (pad, pad), (0, 0), (0, 0)))
    c = x.shape[1]
    acc = sum(x2p[:, k:k + c] for k in range(local_size))
    div = acc / float(local_size)
    div = jnp.power(div * alpha + 1.0, beta)
    return x / div


if __name__ == "__main__":
    key = jax.random.PRNGKey(0)

    # Matches LRN() default construction: local_size=1, alpha=1.0, beta=0.75.
    x = jax.random.normal(key, (2, 4, 16, 16), dtype=jnp.float32)
    out = jax.block_until_ready(lrn(x, local_size=1, alpha=1.0, beta=0.75))
    ref = _lrn_ref(x, local_size=1, alpha=1.0, beta=0.75)
    assert jnp.allclose(out, ref, atol=2e-5, rtol=2e-5), "mismatch (local_size=1)"

    # Also exercise the general cross-channel (banded-matmul) path.
    x2 = jax.random.normal(jax.random.PRNGKey(1), (2, 16, 8, 8), dtype=jnp.float32)
    out2 = jax.block_until_ready(lrn(x2, local_size=5, alpha=1e-2, beta=0.75))
    ref2 = _lrn_ref(x2, local_size=5, alpha=1e-2, beta=0.75)
    assert jnp.allclose(out2, ref2, atol=2e-5, rtol=2e-5), "mismatch (local_size=5)"

    print("KERNEL_OK")
</pallas_src>

<mosaic_0001>
module attributes {stable_mosaic.version = 11 : i64} {
  func.func @_lrn_elementwise_kernel(%arg0: i32, %arg1: memref<2x1024xf32, #tpu.memory_space<vmem>>, %arg2: memref<2x1024xf32, #tpu.memory_space<vmem>>) attributes {dimension_semantics = [#tpu.dimension_semantics<parallel>], iteration_bounds = array<i64: 1>, scalar_prefetch = 0 : i64, scratch_operands = 0 : i64, tpu.core_type = #tpu.core_type<tc>, window_params = [{transform_indices = @transform_0, window_bounds = array<i64: 2, 1024>}, {transform_indices = @transform_1, window_bounds = array<i64: 2, 1024>}]} {
    %c0 = arith.constant 0 : index
    %c0_0 = arith.constant 0 : index
    %0 = vector.load %arg1[%c0, %c0_0] : memref<2x1024xf32, #tpu.memory_space<vmem>>, vector<2x1024xf32>
    %1 = arith.mulf %0, %0 : vector<2x1024xf32>
    %cst = arith.constant 1.000000e+00 : f32
    %2 = vector.broadcast %cst : f32 to vector<2x1024xf32>
    %3 = arith.mulf %1, %2 : vector<2x1024xf32>
    %cst_1 = arith.constant 1.000000e+00 : f32
    %4 = vector.broadcast %cst_1 : f32 to vector<2x1024xf32>
    %5 = arith.addf %3, %4 : vector<2x1024xf32>
    %6 = math.rsqrt %5 : vector<2x1024xf32>
    %7 = math.sqrt %6 : vector<2x1024xf32>
    %8 = arith.mulf %6, %7 : vector<2x1024xf32>
    %9 = arith.mulf %0, %8 : vector<2x1024xf32>
    %c0_2 = arith.constant 0 : index
    %c0_3 = arith.constant 0 : index
    %10 = vector.load %arg2[%c0_2, %c0_3] : memref<2x1024xf32, #tpu.memory_space<vmem>>, vector<2x1024xf32>
    tpu.vector_store %arg2[%c0_2, %c0_3], %9 {strides = array<i32>} : memref<2x1024xf32, #tpu.memory_space<vmem>>, vector<2x1024xf32>,
    return
  }
  func.func @transform_0(%arg0: i32) -> (i32, i32) {
    %c0_i32 = arith.constant 0 : i32
    %c0_i32_0 = arith.constant 0 : i32
    return %arg0, %c0_i32 : i32, i32
  }
  func.func @transform_1(%arg0: i32) -> (i32, i32) {
    %c0_i32 = arith.constant 0 : i32
    %c0_i32_0 = arith.constant 0 : i32
    return %arg0, %c0_i32 : i32, i32
  }
}

</mosaic_0001>

<llo_original>
// kernel: tpu_custom_call.1
$region0: #{tpu_custom_call.1}
  #allocation0 [shape = 'u32[]', space=smem, size = 0x4, offset = 0x4, fixed_abs, tag = 'smem constant byte address 0x4 - core index']
  #allocation1 [shape = 'u32[144,128]{1,0:T(1,128)}', space=vmem, size = 0x12000, scoped, tag = 'internal scratch']
  %s0 = inlined_call_operand.hbm [shape: f32[2,1024], index: 0, kind: input, shape index: {}]
  %s1 = inlined_call_operand.hbm [shape: f32[2,1024], index: 1, kind: output, shape index: {}]
  %s2 = sld [smem:[#allocation0]]
  $region18: #{tpu_custom_call.1} parent=0
    _
  %s4 = ssub.s32 1, %s2
  %s5 = scalar_select 0, %s4, %s2
  $region1: #{tpu_custom_call.1} parent=0
    #allocation2 [shape = 'u8[8192]{0}', space=vmem, size = 0x2000, scoped, tag = 'input window, operand 0, single buffered']
    #allocation3 [shape = 's32[1]{0}', space=sflag, size = 0x4, scoped, tag = 'scoped memory for tpu_custom_call.1']
    #allocation4 [shape = 's32[1]{0}', space=sflag, size = 0x4, scoped, tag = 'scoped memory for tpu_custom_call.1']
    #allocation5 [shape = 'u8[8192]{0}', space=vmem, size = 0x2000, scoped, tag = 'output window, operand 0, single buffered']
    %6 = vsyncpa [#allocation3], 0
    %7 = vsyncpa [#allocation4], 0
    // Predicated region
    $region2: #{tpu_custom_call.1} parent=1 // pred_check
      _
    $region3: #{tpu_custom_call.1} parent=1 // pred_check_branch
      %9 = sbr.rel (0) target = $region5
    $region4: #{tpu_custom_call.1} parent=1 // pred_region
      %s11 = ssub.s32 256, 256
      %12 = vsyncadd [#allocation3], %s11
      %s14 = sshll.u32 [#allocation2], 4
      %s15 = int_to_ptr.vmem [resolvable:$true] %s14
      %17 = dma.hbm_to_vmem [thread:$0]  %s0, 256, %s15, [#allocation3]
    $region5: #{tpu_custom_call.1} parent=1 // pred_fallthru
      _
    // Predicated region
    $region6: #{tpu_custom_call.1} parent=1 // pred_check
      _
    $region7: #{tpu_custom_call.1} parent=1 // pred_check_branch
      %19 = sbr.rel (0) target = $region9
    $region8: #{tpu_custom_call.1} parent=1 // pred_region
      %20 = dma.done [#allocation3], 256
    $region9: #{tpu_custom_call.1} parent=1 // pred_fallthru
      _
    %v21 = vld [vmem:[#allocation2] sm:$0xff]
    %v22 = vld [vmem:[#allocation2 + $0x8] sm:$0xff]
    %v23 = vmul.f32 %v21, %v21
    %v24 = vmul.f32 %v22, %v22
    %v25 = vadd.f32 %v23, 1.0
    %v26 = vadd.f32 %v24, 1.0
    %v27 = vrsqrt.pop %v25
    %v28 = vrsqrt.pop %v26
    %v29 = vrsqrt.pop %v27
    %v30 = vmul.f32 %v27, %v29
    %vm31 = vcmp.eq.f32.partialorder %v27, inf
    %v32 = vsel %vm31, %v27, %v30
    %vm33 = vcmp.eq.f32.partialorder %v27, 0.0
    %v34 = vand.u32 %v27, 2147483648
    %v35 = vsel %vm33, %v34, %v32
    %v36 = vrsqrt.pop %v28
    %v37 = vmul.f32 %v28, %v36
    %vm38 = vcmp.eq.f32.partialorder %v28, inf
    %v39 = vsel %vm38, %v28, %v37
    %vm40 = vcmp.eq.f32.partialorder %v28, 0.0
    %v41 = vand.u32 %v28, 2147483648
    %v42 = vsel %vm40, %v41, %v39
    %v43 = vmul.f32 %v27, %v35
    %v44 = vmul.f32 %v28, %v42
    %v45 = vmul.f32 %v21, %v43
    %v46 = vmul.f32 %v22, %v44
    %47 = vst [vmem:[#allocation5] sm:$0xff] %v45
    %48 = vst [vmem:[#allocation5 + $0x8] sm:$0xff] %v46
    // Predicated region
    $region10: #{tpu_custom_call.1} parent=1 // pred_check
      _
    $region11: #{tpu_custom_call.1} parent=1 // pred_check_branch
      %50 = sbr.rel (0) target = $region13
    $region12: #{tpu_custom_call.1} parent=1 // pred_region
      %s52 = ssub.s32 256, 256
      %53 = vsyncadd [#allocation4], %s52
      %s55 = sshll.u32 [#allocation5], 4
      %s56 = int_to_ptr.vmem [resolvable:$true] %s55
      %58 = dma.vmem_to_hbm [thread:$0]  %s56, 256, %s1, [#allocation4]
    $region13: #{tpu_custom_call.1} parent=1 // pred_fallthru
      _
    // Predicated region
    $region14: #{tpu_custom_call.1} parent=1 // pred_check
      _
    $region15: #{tpu_custom_call.1} parent=1 // pred_check_branch
      %60 = sbr.rel (0) target = $region17
    $region16: #{tpu_custom_call.1} parent=1 // pred_region
      %61 = dma.done [#allocation4], 256
    $region17: #{tpu_custom_call.1} parent=1 // pred_fallthru
      _
    %62 = vsyncpa [#allocation3], 1
    %63 = vsyncpa [#allocation4], 1

</llo_original>
